<compile_context>
chip_gen: v5e
topology: v5e:2x2
jax: 0.10.0
libtpu: 0.0.40
codegen_flags: <defaults>
</compile_context>

<pallas_src>
import jax
import jax.numpy as jnp
from jax.experimental import pallas as pl
from jax.experimental.pallas import tpu as pltpu

_IMG_FEATURES = 1536
_LANE = 128
_SUBLANE = 8
_MAX_TB = 512
_VMEM_CAP_BYTES = 64 << 20   # smallest physical VMEM per TensorCore (v7x)


def _round_up(x, m):
    return ((x + m - 1) // m) * m


def _choose_tb(b_pad):
    """Batch tile: as large as possible (<= 512 rows) while keeping >= 2 grid
    steps when the batch allows (v7x has 2 TensorCores).  Multiple of 8."""
    tb = _round_up((b_pad + 1) // 2, _SUBLANE)
    return max(_SUBLANE, min(_MAX_TB, tb))


# ----------------------------------------------------------------------------
# Fused kernel: image linear (MXU) + user-embedding gather (grouped row copies)
#   users_sm : (grid*TB,) int32 in SMEM (scalar prefetch)
#   images   : (TB, 1536) f32    (cast to bf16 in-kernel)
#   w        : (1536, Dp) bf16   (resident, single-buffered)
#   b        : (1, Dp) f32       (resident, single-buffered)
#   table    : (nusers, Dp) f32  (resident, single-buffered)
#   outputs  : u_emb (TB, Dp) f32, img_emb (TB, Dp) f32 (lane-dense stores)
# ----------------------------------------------------------------------------
def _fused_kernel(users_sm, images_ref, w_ref, b_ref, table_ref,
                  u_out_ref, img_out_ref):
    # ---- Image linear: bf16 x bf16 -> f32 accumulate on the MXU.
    x = images_ref[...].astype(jnp.bfloat16)
    acc = jnp.dot(x, w_ref[...], preferred_element_type=jnp.float32)
    img_out_ref[...] = (acc + b_ref[...]).astype(img_out_ref.dtype)

    # ---- User-embedding gather.  Combine 8 gathered rows in registers
    #      (masked (1, Dp) loads + VPU selects) and write one unmasked (8, Dp)
    #      store per group: load slots + VPU instead of the single store slot,
    #      so the gather hides under the matmul.
    tb, dp = u_out_ref.shape
    n_groups = tb // _SUBLANE
    base = pl.program_id(0) * tb
    sub = jax.lax.broadcasted_iota(jnp.int32, (_SUBLANE, dp), 0)

    def gather_group(g, carry):
        off = pl.multiple_of(g * _SUBLANE, _SUBLANE)
        group = jnp.zeros((_SUBLANE, dp), jnp.float32)
        for j in range(_SUBLANE):
            uid = users_sm[base + off + j]                   # scalar SMEM read
            row = table_ref[pl.ds(uid, 1), :]                # (1, Dp) row load
            group = jnp.where(sub == j,
                              jnp.broadcast_to(row, (_SUBLANE, dp)),
                              group)
        u_out_ref[pl.ds(off, _SUBLANE), :] = group           # unmasked store
        return carry

    jax.lax.fori_loop(0, n_groups, gather_group, 0,
                      unroll=min(8, n_groups))


def _fused_forward(users, images, w_t_pad, bias_pad, table_pad, *, tb):
    """users: (grid*tb,) int32, images: (B8, 1536) f32.
    Returns (B8, Dp) f32 user embeddings and (B8, Dp) f32 image embeddings."""
    b_pad, k = images.shape
    nusers, dp = table_pad.shape
    grid = (pl.cdiv(b_pad, tb),)

    # VMEM budget: conservatively assume 2 buffers even for the single-buffered
    # resident operands, plus margin.
    resident = nusers * dp * 4 + k * dp * 2 + dp * 4
    streamed = 2 * (tb * k * 4 + 2 * tb * dp * 4)
    vmem_limit = max(32 << 20, 2 * resident + streamed + (2 << 20))
    if vmem_limit > _VMEM_CAP_BYTES:
        # TODO(synk): large-nusers HBM DMA-gather path (memory_space=pl.ANY +
        # pltpu.make_async_copy) required here; not implemented.
        raise NotImplementedError(
            f"VMEM-resident embedding table needs ~{vmem_limit >> 20} MiB; "
            "use an HBM DMA-gather path for this many users.")

    return pl.pallas_call(
        _fused_kernel,
        out_shape=(
            jax.ShapeDtypeStruct((b_pad, dp), jnp.float32),
            jax.ShapeDtypeStruct((b_pad, dp), jnp.float32),
        ),
        grid_spec=pltpu.PrefetchScalarGridSpec(
            num_scalar_prefetch=1,
            grid=grid,
            in_specs=[
                pl.BlockSpec((tb, k), lambda i, u: (i, 0)),        # images tile
                pl.BlockSpec((k, dp), lambda i, u: (0, 0),         # weight
                             pipeline_mode=pl.Buffered(1)),
                pl.BlockSpec((1, dp), lambda i, u: (0, 0),         # bias
                             pipeline_mode=pl.Buffered(1)),
                pl.BlockSpec((nusers, dp), lambda i, u: (0, 0),    # emb table
                             pipeline_mode=pl.Buffered(1)),
            ],
            out_specs=[
                pl.BlockSpec((tb, dp), lambda i, u: (i, 0)),       # u_emb tile
                pl.BlockSpec((tb, dp), lambda i, u: (i, 0)),       # img_emb tile
            ],
        ),
        compiler_params=pltpu.CompilerParams(
            dimension_semantics=("parallel",),
            vmem_limit_bytes=int(vmem_limit),
        ),
    )(users, images, w_t_pad, bias_pad, table_pad)


# ----------------------------------------------------------------------------
# Module wrapper
# ----------------------------------------------------------------------------
class ImageAutorshipEmbeddingBlock:
    def __init__(self, d, nusers, initrange=0.05, key=None):
        if key is None:
            key = jax.random.PRNGKey(0)
        k_emb, k_fc = jax.random.split(key)
        self.d = d
        self.nusers = nusers
        self.d_pad = _round_up(d, _LANE)

        # Logical (PyTorch-layout) parameters, uniform(-initrange, initrange).
        self.u_emb_weight = jax.random.uniform(
            k_emb, (nusers, d), jnp.float32, -initrange, initrange)
        self.img_fc_weight = jax.random.uniform(          # [d, 1536] like nn.Linear
            k_fc, (d, _IMG_FEATURES), jnp.float32, -initrange, initrange)
        self.img_fc_bias = jnp.zeros((d,), jnp.float32)

        # Kernel-facing copies: lane-padded to Dp; weight pre-transposed + bf16.
        pad = self.d_pad - d
        self._w_t_pad = jnp.pad(self.img_fc_weight.T, ((0, 0), (0, pad))
                                ).astype(jnp.bfloat16)             # (1536, Dp)
        self._bias_pad = jnp.pad(self.img_fc_bias, (0, pad)
                                 ).reshape(1, self.d_pad)          # (1, Dp)
        self._table_pad = jnp.pad(self.u_emb_weight, ((0, 0), (0, pad))
                                  )                                # (nusers, Dp)

    def __call__(self, users, images):
        users = jnp.asarray(users, jnp.int32)
        images = jnp.asarray(images, jnp.float32)
        B = users.shape[0]

        # Out-of-range ids are clamped (PyTorch Embedding would raise).
        users = jnp.clip(users, 0, self.nusers - 1)

        # Pad the batch only to the f32 sublane granule (8); the tiny id vector
        # is padded to grid*TB so in-kernel SMEM reads never go out of bounds.
        b8 = _round_up(B, _SUBLANE)
        tb = _choose_tb(b8)
        grid_steps = pl.cdiv(b8, tb)
        if b8 != B:
            images = jnp.pad(images, ((0, b8 - B), (0, 0)))
        users = jnp.pad(users, (0, grid_steps * tb - B))

        u_pad, img_pad = _fused_forward(
            users, images, self._w_t_pad, self._bias_pad, self._table_pad, tb=tb)
        return u_pad[:B, :self.d], img_pad[:B, :self.d]


if __name__ == "__main__":
    key = jax.random.PRNGKey(0)
    k_users, k_images, k_params = jax.random.split(key, 3)

    B = 12          # not a multiple of 8: exercises the minimal-padding path
    d = 48
    nusers = 64

    users = jax.random.randint(k_users, (B,), 0, nusers, jnp.int32)
    images = jax.random.normal(k_images, (B, _IMG_FEATURES), jnp.float32)

    block = ImageAutorshipEmbeddingBlock(d=d, nusers=nusers, key=k_params)
    u_emb, img_emb = block(users, images)
    jax.block_until_ready((u_emb, img_emb))

    # References: exact gather; linear reference uses the same bf16-input /
    # f32-accumulate precision as the kernel.
    u_ref = jnp.take(block.u_emb_weight, users, axis=0)
    img_ref = jnp.dot(images.astype(jnp.bfloat16),
                      block.img_fc_weight.T.astype(jnp.bfloat16),
                      preferred_element_type=jnp.float32) + block.img_fc_bias

    assert u_emb.shape == (B, d) and img_emb.shape == (B, d)
    assert jnp.allclose(u_emb, u_ref, atol=1e-6), "embedding gather mismatch"
    assert jnp.allclose(img_emb, img_ref, atol=2e-3, rtol=2e-3), "linear mismatch"

    print("KERNEL_OK")
</pallas_src>

<mosaic_0001>
module attributes {stable_mosaic.version = 11 : i64} {
  func.func @_fused_kernel(%arg0: i32, %arg1: memref<16xi32, #tpu.memory_space<smem>>, %arg2: memref<8x1536xf32, #tpu.memory_space<vmem>>, %arg3: memref<1536x128xbf16, #tpu.memory_space<vmem>>, %arg4: memref<1x128xf32, #tpu.memory_space<vmem>>, %arg5: memref<64x128xf32, #tpu.memory_space<vmem>>, %arg6: memref<8x128xf32, #tpu.memory_space<vmem>>, %arg7: memref<8x128xf32, #tpu.memory_space<vmem>>) attributes {dimension_semantics = [#tpu.dimension_semantics<parallel>], iteration_bounds = array<i64: 2>, scalar_prefetch = 1 : i64, scratch_operands = 0 : i64, tpu.core_type = #tpu.core_type<tc>, window_params = [{transform_indices = @transform_0, window_bounds = array<i64: 8, 1536>}, {pipeline_mode = #tpu.pipeline_mode<synchronous>, transform_indices = @transform_1, window_bounds = array<i64: 1536, 128>}, {pipeline_mode = #tpu.pipeline_mode<synchronous>, transform_indices = @transform_2, window_bounds = array<i64: 1, 128>}, {pipeline_mode = #tpu.pipeline_mode<synchronous>, transform_indices = @transform_3, window_bounds = array<i64: 64, 128>}, {transform_indices = @transform_4, window_bounds = array<i64: 8, 128>}, {transform_indices = @transform_5, window_bounds = array<i64: 8, 128>}]} {
    %c0 = arith.constant 0 : index
    %c0_0 = arith.constant 0 : index
    %0 = vector.load %arg2[%c0, %c0_0] : memref<8x1536xf32, #tpu.memory_space<vmem>>, vector<8x1536xf32>
    %1 = arith.truncf %0 : vector<8x1536xf32> to vector<8x1536xbf16>
    %c0_1 = arith.constant 0 : index
    %c0_2 = arith.constant 0 : index
    %2 = vector.load %arg3[%c0_1, %c0_2] : memref<1536x128xbf16, #tpu.memory_space<vmem>>, vector<1536x128xbf16>
    %cst = arith.constant dense<0.000000e+00> : vector<8x128xf32>
    %3 = tpu.matmul %1, %2, %cst {dimension_numbers = #tpu.dot_dimension_numbers<[1], [0], [0], [1], [0, 0, 1, 1], [], []>} : vector<8x1536xbf16>, vector<1536x128xbf16>, vector<8x128xf32> -> vector<8x128xf32>
    %c0_3 = arith.constant 0 : index
    %c0_4 = arith.constant 0 : index
    %4 = vector.load %arg4[%c0_3, %c0_4] : memref<1x128xf32, #tpu.memory_space<vmem>>, vector<1x128xf32>
    %5 = vector.broadcast %4 : vector<1x128xf32> to vector<8x128xf32>
    %6 = arith.addf %3, %5 : vector<8x128xf32>
    %c0_5 = arith.constant 0 : index
    %c0_6 = arith.constant 0 : index
    %7 = vector.load %arg7[%c0_5, %c0_6] : memref<8x128xf32, #tpu.memory_space<vmem>>, vector<8x128xf32>
    tpu.vector_store %arg7[%c0_5, %c0_6], %6 {strides = array<i32>} : memref<8x128xf32, #tpu.memory_space<vmem>>, vector<8x128xf32>,
    %c8_i32 = arith.constant 8 : i32
    %8 = arith.muli %arg0, %c8_i32 : i32
    %9 = tpu.iota {dimensions = array<i32: 0>} : vector<8x128xi32>
    %c0_i32 = arith.constant 0 : i32
    %c8_i32_7 = arith.constant 8 : i32
    %10 = arith.muli %c0_i32, %c8_i32_7 : i32
    %11 = tpu.assume_multiple %10, 8 : i32
    %cst_8 = arith.constant 0.000000e+00 : f32
    %12 = vector.broadcast %cst_8 : f32 to vector<8x128xf32>
    %13 = arith.addi %8, %11 : i32
    %c0_i32_9 = arith.constant 0 : i32
    %14 = arith.addi %13, %c0_i32_9 : i32
    %15 = arith.index_cast %14 : i32 to index
    %16 = memref.load %arg1[%15] : memref<16xi32, #tpu.memory_space<smem>>
    %17 = arith.index_cast %16 : i32 to index
    %c0_10 = arith.constant 0 : index
    %18 = vector.load %arg5[%17, %c0_10] : memref<64x128xf32, #tpu.memory_space<vmem>>, vector<1x128xf32>
    %c0_i32_11 = arith.constant 0 : i32
    %19 = vector.broadcast %c0_i32_11 : i32 to vector<8x128xi32>
    %20 = arith.cmpi eq, %9, %19 : vector<8x128xi32>
    %21 = vector.shape_cast %18 : vector<1x128xf32> to vector<1x128xf32>
    %22 = vector.broadcast %21 : vector<1x128xf32> to vector<8x128xf32>
    %23 = arith.select %20, %22, %12 : vector<8x128xi1>, vector<8x128xf32>
    %24 = arith.addi %8, %11 : i32
    %c1_i32 = arith.constant 1 : i32
    %25 = arith.addi %24, %c1_i32 : i32
    %26 = arith.index_cast %25 : i32 to index
    %27 = memref.load %arg1[%26] : memref<16xi32, #tpu.memory_space<smem>>
    %28 = arith.index_cast %27 : i32 to index
    %c0_12 = arith.constant 0 : index
    %29 = vector.load %arg5[%28, %c0_12] : memref<64x128xf32, #tpu.memory_space<vmem>>, vector<1x128xf32>
    %c1_i32_13 = arith.constant 1 : i32
    %30 = vector.broadcast %c1_i32_13 : i32 to vector<8x128xi32>
    %31 = arith.cmpi eq, %9, %30 : vector<8x128xi32>
    %32 = vector.shape_cast %29 : vector<1x128xf32> to vector<1x128xf32>
    %33 = vector.broadcast %32 : vector<1x128xf32> to vector<8x128xf32>
    %34 = arith.select %31, %33, %23 : vector<8x128xi1>, vector<8x128xf32>
    %35 = arith.addi %8, %11 : i32
    %c2_i32 = arith.constant 2 : i32
    %36 = arith.addi %35, %c2_i32 : i32
    %37 = arith.index_cast %36 : i32 to index
    %38 = memref.load %arg1[%37] : memref<16xi32, #tpu.memory_space<smem>>
    %39 = arith.index_cast %38 : i32 to index
    %c0_14 = arith.constant 0 : index
    %40 = vector.load %arg5[%39, %c0_14] : memref<64x128xf32, #tpu.memory_space<vmem>>, vector<1x128xf32>
    %c2_i32_15 = arith.constant 2 : i32
    %41 = vector.broadcast %c2_i32_15 : i32 to vector<8x128xi32>
    %42 = arith.cmpi eq, %9, %41 : vector<8x128xi32>
    %43 = vector.shape_cast %40 : vector<1x128xf32> to vector<1x128xf32>
    %44 = vector.broadcast %43 : vector<1x128xf32> to vector<8x128xf32>
    %45 = arith.select %42, %44, %34 : vector<8x128xi1>, vector<8x128xf32>
    %46 = arith.addi %8, %11 : i32
    %c3_i32 = arith.constant 3 : i32
    %47 = arith.addi %46, %c3_i32 : i32
    %48 = arith.index_cast %47 : i32 to index
    %49 = memref.load %arg1[%48] : memref<16xi32, #tpu.memory_space<smem>>
    %50 = arith.index_cast %49 : i32 to index
    %c0_16 = arith.constant 0 : index
    %51 = vector.load %arg5[%50, %c0_16] : memref<64x128xf32, #tpu.memory_space<vmem>>, vector<1x128xf32>
    %c3_i32_17 = arith.constant 3 : i32
    %52 = vector.broadcast %c3_i32_17 : i32 to vector<8x128xi32>
    %53 = arith.cmpi eq, %9, %52 : vector<8x128xi32>
    %54 = vector.shape_cast %51 : vector<1x128xf32> to vector<1x128xf32>
    %55 = vector.broadcast %54 : vector<1x128xf32> to vector<8x128xf32>
    %56 = arith.select %53, %55, %45 : vector<8x128xi1>, vector<8x128xf32>
    %57 = arith.addi %8, %11 : i32
    %c4_i32 = arith.constant 4 : i32
    %58 = arith.addi %57, %c4_i32 : i32
    %59 = arith.index_cast %58 : i32 to index
    %60 = memref.load %arg1[%59] : memref<16xi32, #tpu.memory_space<smem>>
    %61 = arith.index_cast %60 : i32 to index
    %c0_18 = arith.constant 0 : index
    %62 = vector.load %arg5[%61, %c0_18] : memref<64x128xf32, #tpu.memory_space<vmem>>, vector<1x128xf32>
    %c4_i32_19 = arith.constant 4 : i32
    %63 = vector.broadcast %c4_i32_19 : i32 to vector<8x128xi32>
    %64 = arith.cmpi eq, %9, %63 : vector<8x128xi32>
    %65 = vector.shape_cast %62 : vector<1x128xf32> to vector<1x128xf32>
    %66 = vector.broadcast %65 : vector<1x128xf32> to vector<8x128xf32>
    %67 = arith.select %64, %66, %56 : vector<8x128xi1>, vector<8x128xf32>
    %68 = arith.addi %8, %11 : i32
    %c5_i32 = arith.constant 5 : i32
    %69 = arith.addi %68, %c5_i32 : i32
    %70 = arith.index_cast %69 : i32 to index
    %71 = memref.load %arg1[%70] : memref<16xi32, #tpu.memory_space<smem>>
    %72 = arith.index_cast %71 : i32 to index
    %c0_20 = arith.constant 0 : index
    %73 = vector.load %arg5[%72, %c0_20] : memref<64x128xf32, #tpu.memory_space<vmem>>, vector<1x128xf32>
    %c5_i32_21 = arith.constant 5 : i32
    %74 = vector.broadcast %c5_i32_21 : i32 to vector<8x128xi32>
    %75 = arith.cmpi eq, %9, %74 : vector<8x128xi32>
    %76 = vector.shape_cast %73 : vector<1x128xf32> to vector<1x128xf32>
    %77 = vector.broadcast %76 : vector<1x128xf32> to vector<8x128xf32>
    %78 = arith.select %75, %77, %67 : vector<8x128xi1>, vector<8x128xf32>
    %79 = arith.addi %8, %11 : i32
    %c6_i32 = arith.constant 6 : i32
    %80 = arith.addi %79, %c6_i32 : i32
    %81 = arith.index_cast %80 : i32 to index
    %82 = memref.load %arg1[%81] : memref<16xi32, #tpu.memory_space<smem>>
    %83 = arith.index_cast %82 : i32 to index
    %c0_22 = arith.constant 0 : index
    %84 = vector.load %arg5[%83, %c0_22] : memref<64x128xf32, #tpu.memory_space<vmem>>, vector<1x128xf32>
    %c6_i32_23 = arith.constant 6 : i32
    %85 = vector.broadcast %c6_i32_23 : i32 to vector<8x128xi32>
    %86 = arith.cmpi eq, %9, %85 : vector<8x128xi32>
    %87 = vector.shape_cast %84 : vector<1x128xf32> to vector<1x128xf32>
    %88 = vector.broadcast %87 : vector<1x128xf32> to vector<8x128xf32>
    %89 = arith.select %86, %88, %78 : vector<8x128xi1>, vector<8x128xf32>
    %90 = arith.addi %8, %11 : i32
    %c7_i32 = arith.constant 7 : i32
    %91 = arith.addi %90, %c7_i32 : i32
    %92 = arith.index_cast %91 : i32 to index
    %93 = memref.load %arg1[%92] : memref<16xi32, #tpu.memory_space<smem>>
    %94 = arith.index_cast %93 : i32 to index
    %c0_24 = arith.constant 0 : index
    %95 = vector.load %arg5[%94, %c0_24] : memref<64x128xf32, #tpu.memory_space<vmem>>, vector<1x128xf32>
    %c7_i32_25 = arith.constant 7 : i32
    %96 = vector.broadcast %c7_i32_25 : i32 to vector<8x128xi32>
    %97 = arith.cmpi eq, %9, %96 : vector<8x128xi32>
    %98 = vector.shape_cast %95 : vector<1x128xf32> to vector<1x128xf32>
    %99 = vector.broadcast %98 : vector<1x128xf32> to vector<8x128xf32>
    %100 = arith.select %97, %99, %89 : vector<8x128xi1>, vector<8x128xf32>
    %101 = arith.index_cast %11 : i32 to index
    %c0_26 = arith.constant 0 : index
    %102 = vector.load %arg6[%101, %c0_26] : memref<8x128xf32, #tpu.memory_space<vmem>>, vector<8x128xf32>
    tpu.vector_store %arg6[%101, %c0_26], %100 {strides = array<i32>} : memref<8x128xf32, #tpu.memory_space<vmem>>, vector<8x128xf32>,
    %c1_i32_27 = arith.constant 1 : i32
    return
  }
  func.func @transform_0(%arg0: i32, %arg1: memref<16xi32, #tpu.memory_space<smem>>) -> (i32, i32) {
    %c0_i32 = arith.constant 0 : i32
    %c0_i32_0 = arith.constant 0 : i32
    return %arg0, %c0_i32 : i32, i32
  }
  func.func @transform_1(%arg0: i32, %arg1: memref<16xi32, #tpu.memory_space<smem>>) -> (i32, i32) {
    %c0_i32 = arith.constant 0 : i32
    %c0_i32_0 = arith.constant 0 : i32
    %c0_i32_1 = arith.constant 0 : i32
    return %c0_i32, %c0_i32_0 : i32, i32
  }
  func.func @transform_2(%arg0: i32, %arg1: memref<16xi32, #tpu.memory_space<smem>>) -> (i32, i32) {
    %c0_i32 = arith.constant 0 : i32
    %c0_i32_0 = arith.constant 0 : i32
    %c0_i32_1 = arith.constant 0 : i32
    return %c0_i32, %c0_i32_0 : i32, i32
  }
  func.func @transform_3(%arg0: i32, %arg1: memref<16xi32, #tpu.memory_space<smem>>) -> (i32, i32) {
    %c0_i32 = arith.constant 0 : i32
    %c0_i32_0 = arith.constant 0 : i32
    %c0_i32_1 = arith.constant 0 : i32
    return %c0_i32, %c0_i32_0 : i32, i32
  }
  func.func @transform_4(%arg0: i32, %arg1: memref<16xi32, #tpu.memory_space<smem>>) -> (i32, i32) {
    %c0_i32 = arith.constant 0 : i32
    %c0_i32_0 = arith.constant 0 : i32
    return %arg0, %c0_i32 : i32, i32
  }
  func.func @transform_5(%arg0: i32, %arg1: memref<16xi32, #tpu.memory_space<smem>>) -> (i32, i32) {
    %c0_i32 = arith.constant 0 : i32
    %c0_i32_0 = arith.constant 0 : i32
    return %arg0, %c0_i32 : i32, i32
  }
}

</mosaic_0001>

<llo_original>
// kernel: tpu_custom_call.1
$region0: #{tpu_custom_call.1}
  #allocation0 [shape = 'u32[]', space=smem, size = 0x4, offset = 0x4, fixed_abs, tag = 'smem constant byte address 0x4 - core index']
  #allocation1 [shape = 'u32[72,128]{1,0:T(1,128)}', space=vmem, size = 0x9000, scoped, tag = 'internal scratch']
  #allocation2 [shape = 's32[1]{0}', space=sflag, size = 0x4, scoped, tag = 'scoped memory for tpu_custom_call.1']
  #allocation3 [shape = 'u8[512]{0}', space=smem, size = 0x200, scoped, tag = 'prefetched SMEM operand 0']
  %s0 = inlined_call_operand.hbm [shape: s32[16], index: 0, kind: input, shape index: {}]
  %s1 = inlined_call_operand.hbm [shape: f32[16,1536], index: 1, kind: input, shape index: {}]
  %s2 = inlined_call_operand.hbm [shape: bf16[1536,128], index: 2, kind: input, shape index: {}]
  %s3 = inlined_call_operand.vmem [shape: f32[1,128], index: 3, kind: input, shape index: {}]
  %s4 = inlined_call_operand.hbm [shape: f32[64,128], index: 4, kind: input, shape index: {}]
  %s5 = inlined_call_operand.hbm [shape: f32[16,128], index: 5, kind: output, shape index: {0}]
  %s6 = inlined_call_operand.hbm [shape: f32[16,128], index: 6, kind: output, shape index: {1}]
  %7 = xla_tuple %s5, %s6
  %s8 = sld [smem:[#allocation0]]
  $region69: #{tpu_custom_call.1} parent=0
    _
  %s10 = ssub.s32 1, %s8
  %s11 = scalar_select 0, %s10, %s8
  %s13 = sshll.u32 %s0, 4
  %s14 = int_to_ptr.hbm [resolvable:$true] %s13
  %16 = dma.hbm_to_smem %s14, 16, [#allocation3], [#allocation2]
  %18 = dma.done [#allocation2], 16
  %19 = sfence
  $region1: #{tpu_custom_call.1} parent=0
    #allocation4 [shape = 'u8[98304]{0}', space=vmem, size = 0x18000, scoped, tag = 'input window, operand 1']
    #allocation5 [shape = 's32[2]{0}', space=sflag, size = 0x8, scoped, tag = 'scoped memory for tpu_custom_call.1']
    #allocation6 [shape = 's32[2]{0}', space=sflag, size = 0x8, scoped, tag = 'scoped memory for tpu_custom_call.1']
    #allocation7 [shape = 'u8[393216]{0}', space=vmem, size = 0x60000, scoped, tag = 'input window, operand 2, single buffered']
    #allocation8 [shape = 's32[1]{0}', space=sflag, size = 0x4, scoped, tag = 'scoped memory for tpu_custom_call.1']
    #allocation9 [shape = 'u8[32768]{0}', space=vmem, size = 0x8000, scoped, tag = 'input window, operand 4, single buffered']
    #allocation10 [shape = 'u8[8192]{0}', space=vmem, size = 0x2000, scoped, tag = 'output window, operand 0']
    #allocation11 [shape = 'u8[8192]{0}', space=vmem, size = 0x2000, scoped, tag = 'output window, operand 1']
    #allocation12 [shape = 's32[2]{0}', space=sflag, size = 0x8, scoped, tag = 'scoped memory for tpu_custom_call.1']
    %20 = vsyncpa [#allocation5], 0
    %s21 = scalar_lea.sflag [#allocation5], 1
    %22 = vsyncpa %s21, 0
    %23 = vsyncpa [#allocation8], 0
    %24 = vsyncpa [#allocation6], 0
    %s25 = scalar_lea.sflag [#allocation6], 1
    %26 = vsyncpa %s25, 0
    %27 = vsyncpa [#allocation12], 0
    %s28 = scalar_lea.sflag [#allocation12], 1
    %29 = vsyncpa %s28, 0
    loop: start=0, step=1, limit=4
    $region2: #{tpu_custom_call.1} parent=1 // loop_pre_header
      _
    $region3: #{tpu_custom_call.1} parent=1 // loop_header
      %s31 = sphi 0, %s35
      %p32 = scmp.ge.s32.totalorder %s31, 4
      %s41 = sphi 0, %s43
      %s44 = sphi 0, %s41
      %s45 = sphi 0, %s44
      %s61 = sphi 0, %s45
      %s65 = sphi 0, %s65
      %s67 = sphi 0, %s65
      %s68 = sphi 0, %s67
      %s82 = sphi 0, %s68
      %s86 = sphi 0, %s86
      %s88 = sphi 0, %s86
      %s89 = sphi 0, %s88
      %s103 = sphi 0, %s89
      %s107 = sphi 0, %s107
      %s109 = sphi 0, %s107
      %s110 = sphi 0, %s109
      %s124 = sphi 0, %s110
      %s130 = sphi 0, %s132
      %s133 = sphi 0, %s130
      %s134 = sphi 0, %s133
      %s150 = sphi 0, %s134
      %s156 = sphi 0, %s158
      %s159 = sphi 0, %s156
      %s160 = sphi 0, %s159
      %s176 = sphi 0, %s160
    $region4: #{tpu_custom_call.1} parent=1 // loop_header_branch
      %34 = sbr.rel (%p32) target = $region8
    $region5: #{tpu_custom_call.1} parent=1 // loop_body
      %s36 = ssub.s32 %s31, 1
      %s37 = ssub.s32 %s31, 2
      %s38 = sadd.s32 %s31, 1
      %s39 = ssub.s32 %s31, %s38
      %p40 = scmp.eq.s32.totalorder %s39, 0
      %s42 = sadd.s32 %s41, 1
      %s43 = scalar_select %p40, %s41, %s42
      %p46 = pneg %p40
      %p47 = scmp.eq.s32.totalorder %s31, 1
      %p48 = por %p46, %p47
      %p49 = scmp.ne.s32.totalorder %s41, %s44
      %p50 = scmp.eq.s32.totalorder %s31, 0
      %p51 = por %p49, %p50
      %p52 = scmp.ne.s32.totalorder %s41, %s44
      %p53 = scmp.eq.s32.totalorder %s36, 1
      %p54 = por %p52, %p53
      %p55 = scmp.ne.s32.totalorder %s44, %s45
      %p56 = scmp.eq.s32.totalorder %s36, 0
      %p57 = por %p55, %p56
      %p58 = scmp.ne.s32.totalorder %s44, %s45
      %p59 = scmp.eq.s32.totalorder %s37, 1
      %p60 = por %p58, %p59
      %p62 = scmp.ne.s32.totalorder %s45, %s61
      %p63 = scmp.eq.s32.totalorder %s37, 0
      %p64 = por %p62, %p63
      %s66 = sadd.s32 %s65, 1
      %p69 = scmp.eq.s32.totalorder %s31, 1
      %p70 = scmp.ne.s32.totalorder %s65, %s67
      %p71 = scmp.eq.s32.totalorder %s31, 0
      %p72 = por %p70, %p71
      %p73 = scmp.ne.s32.totalorder %s65, %s67
      %p74 = scmp.eq.s32.totalorder %s36, 1
      %p75 = por %p73, %p74
      %p76 = scmp.ne.s32.totalorder %s67, %s68
      %p77 = scmp.eq.s32.totalorder %s36, 0
      %p78 = por %p76, %p77
      %p79 = scmp.ne.s32.totalorder %s67, %s68
      %p80 = scmp.eq.s32.totalorder %s37, 1
      %p81 = por %p79, %p80
      %p83 = scmp.ne.s32.totalorder %s68, %s82
      %p84 = scmp.eq.s32.totalorder %s37, 0
      %p85 = por %p83, %p84
      %s87 = sadd.s32 %s86, 1
      %p90 = scmp.eq.s32.totalorder %s31, 1
      %p91 = scmp.ne.s32.totalorder %s86, %s88
      %p92 = scmp.eq.s32.totalorder %s31, 0
      %p93 = por %p91, %p92
      %p94 = scmp.ne.s32.totalorder %s86, %s88
      %p95 = scmp.eq.s32.totalorder %s36, 1
      %p96 = por %p94, %p95
      %p97 = scmp.ne.s32.totalorder %s88, %s89
      %p98 = scmp.eq.s32.totalorder %s36, 0
      %p99 = por %p97, %p98
      %p100 = scmp.ne.s32.totalorder %s88, %s89
      %p101 = scmp.eq.s32.totalorder %s37, 1
      %p102 = por %p100, %p101
      %p104 = scmp.ne.s32.totalorder %s89, %s103
      %p105 = scmp.eq.s32.totalorder %s37, 0
      %p106 = por %p104, %p105
      %s108 = sadd.s32 %s107, 1
      %p111 = scmp.eq.s32.totalorder %s31, 1
      %p112 = scmp.ne.s32.totalorder %s107, %s109
      %p113 = scmp.eq.s32.totalorder %s31, 0
      %p114 = por %p112, %p113
      %p115 = scmp.ne.s32.totalorder %s107, %s109
      %p116 = scmp.eq.s32.totalorder %s36, 1
      %p117 = por %p115, %p116
      %p118 = scmp.ne.s32.totalorder %s109, %s110
      %p119 = scmp.eq.s32.totalorder %s36, 0
      %p120 = por %p118, %p119
      %p121 = scmp.ne.s32.totalorder %s109, %s110
      %p122 = scmp.eq.s32.totalorder %s37, 1
      %p123 = por %p121, %p122
      %p125 = scmp.ne.s32.totalorder %s110, %s124
      %p126 = scmp.eq.s32.totalorder %s37, 0
      %p127 = por %p125, %p126
      %s128 = ssub.s32 %s31, %s38
      %p129 = scmp.eq.s32.totalorder %s128, 0
      %s131 = sadd.s32 %s130, 1
      %s132 = scalar_select %p129, %s130, %s131
      %p135 = pneg %p129
      %p136 = scmp.eq.s32.totalorder %s31, 1
      %p137 = por %p135, %p136
      %p138 = scmp.ne.s32.totalorder %s130, %s133
      %p139 = scmp.eq.s32.totalorder %s31, 0
      %p140 = por %p138, %p139
      %p141 = scmp.ne.s32.totalorder %s130, %s133
      %p142 = scmp.eq.s32.totalorder %s36, 1
      %p143 = por %p141, %p142
      %p144 = scmp.ne.s32.totalorder %s133, %s134
      %p145 = scmp.eq.s32.totalorder %s36, 0
      %p146 = por %p144, %p145
      %p147 = scmp.ne.s32.totalorder %s133, %s134
      %p148 = scmp.eq.s32.totalorder %s37, 1
      %p149 = por %p147, %p148
      %p151 = scmp.ne.s32.totalorder %s134, %s150
      %p152 = scmp.eq.s32.totalorder %s37, 0
      %p153 = por %p151, %p152
      %s154 = ssub.s32 %s31, %s38
      %p155 = scmp.eq.s32.totalorder %s154, 0
      %s157 = sadd.s32 %s156, 1
      %s158 = scalar_select %p155, %s156, %s157
      %p161 = pneg %p155
      %p162 = scmp.eq.s32.totalorder %s31, 1
      %p163 = por %p161, %p162
      %p164 = scmp.ne.s32.totalorder %s156, %s159
      %p165 = scmp.eq.s32.totalorder %s31, 0
      %p166 = por %p164, %p165
      %p167 = scmp.ne.s32.totalorder %s156, %s159
      %p168 = scmp.eq.s32.totalorder %s36, 1
      %p169 = por %p167, %p168
      %p170 = scmp.ne.s32.totalorder %s159, %s160
      %p171 = scmp.eq.s32.totalorder %s36, 0
      %p172 = por %p170, %p171
      %p173 = scmp.ne.s32.totalorder %s159, %s160
      %p174 = scmp.eq.s32.totalorder %s37, 1
      %p175 = por %p173, %p174
      %p177 = scmp.ne.s32.totalorder %s160, %s176
      %p178 = scmp.eq.s32.totalorder %s37, 0
      %p179 = por %p177, %p178
      %p180 = scmp.le.s32.totalorder 1, %s31
      %p181 = scmp.lt.s32.totalorder %s31, 3
      %p182 = pnand %p180, %p181
      %p183 = pneg %p182
      // Predicated region
      $region9: #{tpu_custom_call.1} parent=5 // pred_check
        _
      $region10: #{tpu_custom_call.1} parent=5 // pred_check_branch
        %185 = sbr.rel (%p182) target = $region12
      $region11: #{tpu_custom_call.1} parent=5 // pred_region
        %s186 = ssub.s32 %s31, 1
        // Predicated region
        $region13: #{tpu_custom_call.1} parent=11 // pred_check
          %p187 = pneg %p78
        $region14: #{tpu_custom_call.1} parent=11 // pred_check_branch
          %189 = sbr.rel (%p187) target = $region16
        $region15: #{tpu_custom_call.1} parent=11 // pred_region
          %191 = vsyncadd [#allocation8], 0
          %s192 = sshll.u32 %s2, 4
          %s193 = int_to_ptr.hbm [resolvable:$true] %s192
          %s194 = sshll.u32 [#allocation7], 4
          %s195 = int_to_ptr.vmem [resolvable:$true] %s194
          %200 = dma.hbm_to_vmem [thread:$0]  %s193, 12288, %s195, [#allocation8], 64, 64, 4
        $region16: #{tpu_custom_call.1} parent=11 // pred_fallthru
          _
        // Predicated region
        $region17: #{tpu_custom_call.1} parent=11 // pred_check
          %p201 = pneg %p99
        $region18: #{tpu_custom_call.1} parent=11 // pred_check_branch
          %203 = sbr.rel (%p201) target = $region20
        $region19: #{tpu_custom_call.1} parent=11 // pred_region
          _
        $region20: #{tpu_custom_call.1} parent=11 // pred_fallthru
          _
        // Predicated region
        $region21: #{tpu_custom_call.1} parent=11 // pred_check
          %p204 = pneg %p120
        $region22: #{tpu_custom_call.1} parent=11 // pred_check_branch
          %206 = sbr.rel (%p204) target = $region24
        $region23: #{tpu_custom_call.1} parent=11 // pred_region
          %208 = vsyncadd [#allocation8], 0
          %s209 = sshll.u32 %s4, 4
          %s210 = int_to_ptr.hbm [resolvable:$true] %s209
          %s211 = sshll.u32 [#allocation9], 4
          %s212 = int_to_ptr.vmem [resolvable:$true] %s211
          %217 = dma.hbm_to_vmem [thread:$0]  %s210, 1024, %s212, [#allocation8], 128, 128, 8
        $region24: #{tpu_custom_call.1} parent=11 // pred_fallthru
          _
      $region12: #{tpu_custom_call.1} parent=5 // pred_fallthru
        _
      %p218 = scmp.lt.s32.totalorder %s31, 2
      // Predicated region
      $region25: #{tpu_custom_call.1} parent=5 // pred_check
        %p219 = pneg %p218
      $region26: #{tpu_custom_call.1} parent=5 // pred_check_branch
        %221 = sbr.rel (%p219) target = $region28
      $region27: #{tpu_custom_call.1} parent=5 // pred_region
        // Predicated region
        $region29: #{tpu_custom_call.1} parent=27 // pred_check
          %p222 = pneg %p51
        $region30: #{tpu_custom_call.1} parent=27 // pred_check_branch
          %224 = sbr.rel (%p222) target = $region32
        $region31: #{tpu_custom_call.1} parent=27 // pred_region
          %s225 = sand.u32 %s41, 1
          %s226 = scalar_lea.sflag [#allocation5], %s225
          %s227 = sand.u32 %s41, 1
          %s228 = smul.addr %s227, 96
          %s229 = scalar_lea.vmem [#allocation4], %s228
          %231 = vsyncadd %s226, 0
          %s232 = smul.addr %s31, 12
          %s233 = smul.addr %s232, 8
          %s234 = scalar_lea.hbm %s1, %s233
          %s236 = sshll.u32 %s234, 4
          %s237 = int_to_ptr.hbm [resolvable:$true] %s236
          %s238 = sshll.u32 %s229, 4
          %s239 = int_to_ptr.vmem [resolvable:$true] %s238
          %241 = dma.hbm_to_vmem [thread:$0]  %s237, 1536, %s239, %s226
        $region32: #{tpu_custom_call.1} parent=27 // pred_fallthru
          _
      $region28: #{tpu_custom_call.1} parent=5 // pred_fallthru
        _
      %p242 = scmp.le.s32.totalorder 1, %s31
      %p243 = scmp.lt.s32.totalorder %s31, 3
      %p244 = pnand %p242, %p243
      %p245 = pneg %p244
      // Predicated region
      $region33: #{tpu_custom_call.1} parent=5 // pred_check
        _
      $region34: #{tpu_custom_call.1} parent=5 // pred_check_branch
        %247 = sbr.rel (%p244) target = $region36
      $region35: #{tpu_custom_call.1} parent=5 // pred_region
        %s248 = ssub.s32 %s31, 1
        %s249 = sand.u32 %s44, 1
        %s250 = scalar_lea.sflag [#allocation5], %s249
        %s251 = sand.u32 %s44, 1
        %s252 = smul.addr %s251, 96
        %s253 = scalar_lea.vmem [#allocation4], %s252
        // Predicated region
        $region37: #{tpu_custom_call.1} parent=35 // pred_check
          %p254 = pneg %p57
        $region38: #{tpu_custom_call.1} parent=35 // pred_check_branch
          %256 = sbr.rel (%p254) target = $region40
        $region39: #{tpu_custom_call.1} parent=35 // pred_region
          %258 = dma.done %s250, 1536
        $region40: #{tpu_custom_call.1} parent=35 // pred_fallthru
          _
        // Predicated region
        $region41: #{tpu_custom_call.1} parent=35 // pred_check
          %p259 = pneg %p78
        $region42: #{tpu_custom_call.1} parent=35 // pred_check_branch
          %261 = sbr.rel (%p259) target = $region44
        $region43: #{tpu_custom_call.1} parent=35 // pred_region
          %263 = dma.done [#allocation8], 12288
        $region44: #{tpu_custom_call.1} parent=35 // pred_fallthru
          _
        // Predicated region
        $region45: #{tpu_custom_call.1} parent=35 // pred_check
          %p264 = pneg %p120
        $region46: #{tpu_custom_call.1} parent=35 // pred_check_branch
          %266 = sbr.rel (%p264) target = $region48
        $region47: #{tpu_custom_call.1} parent=35 // pred_region
          %268 = dma.done [#allocation8], 1024
        $region48: #{tpu_custom_call.1} parent=35 // pred_fallthru
          _
        %s269 = sand.u32 %s44, 1
        %s270 = scalar_lea.sflag [#allocation5], %s269
        %s271 = sand.u32 %s44, 1
        %s272 = smul.addr %s271, 96
        %s273 = scalar_lea.vmem [#allocation4], %s272
        %p274 = pneg %p57
        %p275 = pneg %p54
        %p276 = pneg %p78
        %p277 = pneg %p75
        %p278 = pneg %p99
        %p279 = pneg %p96
        %p280 = pneg %p120
        %p281 = pneg %p117
        %p282 = pneg %p146
        %p283 = pneg %p143
        %s284 = sand.u32 %s133, 1
        %s285 = scalar_lea.sflag [#allocation6], %s284
        %s286 = sand.u32 %s133, 1
        %s287 = smul.addr %s286, 8
        %s288 = scalar_lea.vmem [#allocation10], %s287
        %p289 = pneg %p172
        %p290 = pneg %p169
        %s291 = sand.u32 %s159, 1
        %s292 = scalar_lea.sflag [#allocation12], %s291
        %s293 = sand.u32 %s159, 1
        %s294 = smul.addr %s293, 8
        %s295 = scalar_lea.vmem [#allocation11], %s294
        %v296 = vld [vmem:[%s253] sm:$0xff]
        %v297 = vld [vmem:[%s253 + $0x8] sm:$0xff]
        %v298 = vld [vmem:[%s253 + $0x10] sm:$0xff]
        %v299 = vld [vmem:[%s253 + $0x18] sm:$0xff]
        %v300 = vld [vmem:[%s253 + $0x20] sm:$0xff]
        %v301 = vld [vmem:[%s253 + $0x28] sm:$0xff]
        %v302 = vld [vmem:[%s253 + $0x30] sm:$0xff]
        %v303 = vld [vmem:[%s253 + $0x38] sm:$0xff]
        %v304 = vld [vmem:[%s253 + $0x40] sm:$0xff]
        %v305 = vld [vmem:[%s253 + $0x48] sm:$0xff]
        %v306 = vld [vmem:[%s253 + $0x50] sm:$0xff]
        %v307 = vld [vmem:[%s253 + $0x58] sm:$0xff]
        %v308 = vpack.c.bf16 %v296, %v296
        %v309 = vpack.c.bf16 %v297, %v297
        %v310 = vpack.c.bf16 %v298, %v298
        %v311 = vpack.c.bf16 %v299, %v299
        %v312 = vpack.c.bf16 %v300, %v300
        %v313 = vpack.c.bf16 %v301, %v301
        %v314 = vpack.c.bf16 %v302, %v302
        %v315 = vpack.c.bf16 %v303, %v303
        %v316 = vpack.c.bf16 %v304, %v304
        %v317 = vpack.c.bf16 %v305, %v305
        %v318 = vpack.c.bf16 %v306, %v306
        %v319 = vpack.c.bf16 %v307, %v307
        %v320 = vld [vmem:[#allocation7] sm:$0xf]
        %v321 = vld [vmem:[#allocation7 + $0x4] sm:$0xf]
        %v322 = vld [vmem:[#allocation7 + $0x8] sm:$0xf]
        %v323 = vld [vmem:[#allocation7 + $0xc] sm:$0xf]
        %v324 = vld [vmem:[#allocation7 + $0x10] sm:$0xf]
        %v325 = vld [vmem:[#allocation7 + $0x14] sm:$0xf]
        %v326 = vld [vmem:[#allocation7 + $0x18] sm:$0xf]
        %v327 = vld [vmem:[#allocation7 + $0x1c] sm:$0xf]
        %v328 = vld [vmem:[#allocation7 + $0x20] sm:$0xf]
        %v329 = vld [vmem:[#allocation7 + $0x24] sm:$0xf]
        %v330 = vld [vmem:[#allocation7 + $0x28] sm:$0xf]
        %v331 = vld [vmem:[#allocation7 + $0x2c] sm:$0xf]
        %v332 = vld [vmem:[#allocation7 + $0x30] sm:$0xf]
        %v333 = vld [vmem:[#allocation7 + $0x34] sm:$0xf]
        %v334 = vld [vmem:[#allocation7 + $0x38] sm:$0xf]
        %v335 = vld [vmem:[#allocation7 + $0x3c] sm:$0xf]
        %v336 = vld [vmem:[#allocation7 + $0x40] sm:$0xf]
        %v337 = vld [vmem:[#allocation7 + $0x44] sm:$0xf]
        %v338 = vld [vmem:[#allocation7 + $0x48] sm:$0xf]
        %v339 = vld [vmem:[#allocation7 + $0x4c] sm:$0xf]
        %v340 = vld [vmem:[#allocation7 + $0x50] sm:$0xf]
        %v341 = vld [vmem:[#allocation7 + $0x54] sm:$0xf]
        %v342 = vld [vmem:[#allocation7 + $0x58] sm:$0xf]
        %v343 = vld [vmem:[#allocation7 + $0x5c] sm:$0xf]
        %v344 = vld [vmem:[#allocation7 + $0x60] sm:$0xf]
        %v345 = vld [vmem:[#allocation7 + $0x64] sm:$0xf]
        %v346 = vld [vmem:[#allocation7 + $0x68] sm:$0xf]
        %v347 = vld [vmem:[#allocation7 + $0x6c] sm:$0xf]
        %v348 = vld [vmem:[#allocation7 + $0x70] sm:$0xf]
        %v349 = vld [vmem:[#allocation7 + $0x74] sm:$0xf]
        %v350 = vld [vmem:[#allocation7 + $0x78] sm:$0xf]
        %v351 = vld [vmem:[#allocation7 + $0x7c] sm:$0xf]
        %v352 = vld [vmem:[#allocation7 + $0x80] sm:$0xf]
        %v353 = vld [vmem:[#allocation7 + $0x84] sm:$0xf]
        %v354 = vld [vmem:[#allocation7 + $0x88] sm:$0xf]
        %v355 = vld [vmem:[#allocation7 + $0x8c] sm:$0xf]
        %v356 = vld [vmem:[#allocation7 + $0x90] sm:$0xf]
        %v357 = vld [vmem:[#allocation7 + $0x94] sm:$0xf]
        %v358 = vld [vmem:[#allocation7 + $0x98] sm:$0xf]
        %v359 = vld [vmem:[#allocation7 + $0x9c] sm:$0xf]
        %v360 = vld [vmem:[#allocation7 + $0xa0] sm:$0xf]
        %v361 = vld [vmem:[#allocation7 + $0xa4] sm:$0xf]
        %v362 = vld [vmem:[#allocation7 + $0xa8] sm:$0xf]
        %v363 = vld [vmem:[#allocation7 + $0xac] sm:$0xf]
        %v364 = vld [vmem:[#allocation7 + $0xb0] sm:$0xf]
        %v365 = vld [vmem:[#allocation7 + $0xb4] sm:$0xf]
        %v366 = vld [vmem:[#allocation7 + $0xb8] sm:$0xf]
        %v367 = vld [vmem:[#allocation7 + $0xbc] sm:$0xf]
        %v368 = vld [vmem:[#allocation7 + $0xc0] sm:$0xf]
        %v369 = vld [vmem:[#allocation7 + $0xc4] sm:$0xf]
        %v370 = vld [vmem:[#allocation7 + $0xc8] sm:$0xf]
        %v371 = vld [vmem:[#allocation7 + $0xcc] sm:$0xf]
        %v372 = vld [vmem:[#allocation7 + $0xd0] sm:$0xf]
        %v373 = vld [vmem:[#allocation7 + $0xd4] sm:$0xf]
        %v374 = vld [vmem:[#allocation7 + $0xd8] sm:$0xf]
        %v375 = vld [vmem:[#allocation7 + $0xdc] sm:$0xf]
        %v376 = vld [vmem:[#allocation7 + $0xe0] sm:$0xf]
        %v377 = vld [vmem:[#allocation7 + $0xe4] sm:$0xf]
        %v378 = vld [vmem:[#allocation7 + $0xe8] sm:$0xf]
        %v379 = vld [vmem:[#allocation7 + $0xec] sm:$0xf]
        %v380 = vld [vmem:[#allocation7 + $0xf0] sm:$0xf]
        %v381 = vld [vmem:[#allocation7 + $0xf4] sm:$0xf]
        %v382 = vld [vmem:[#allocation7 + $0xf8] sm:$0xf]
        %v383 = vld [vmem:[#allocation7 + $0xfc] sm:$0xf]
        %v384 = vld [vmem:[#allocation7 + $0x100] sm:$0xf]
        %v385 = vld [vmem:[#allocation7 + $0x104] sm:$0xf]
        %v386 = vld [vmem:[#allocation7 + $0x108] sm:$0xf]
        %v387 = vld [vmem:[#allocation7 + $0x10c] sm:$0xf]
        %v388 = vld [vmem:[#allocation7 + $0x110] sm:$0xf]
        %v389 = vld [vmem:[#allocation7 + $0x114] sm:$0xf]
        %v390 = vld [vmem:[#allocation7 + $0x118] sm:$0xf]
        %v391 = vld [vmem:[#allocation7 + $0x11c] sm:$0xf]
        %v392 = vld [vmem:[#allocation7 + $0x120] sm:$0xf]
        %v393 = vld [vmem:[#allocation7 + $0x124] sm:$0xf]
        %v394 = vld [vmem:[#allocation7 + $0x128] sm:$0xf]
        %v395 = vld [vmem:[#allocation7 + $0x12c] sm:$0xf]
        %v396 = vld [vmem:[#allocation7 + $0x130] sm:$0xf]
        %v397 = vld [vmem:[#allocation7 + $0x134] sm:$0xf]
        %v398 = vld [vmem:[#allocation7 + $0x138] sm:$0xf]
        %v399 = vld [vmem:[#allocation7 + $0x13c] sm:$0xf]
        %v400 = vld [vmem:[#allocation7 + $0x140] sm:$0xf]
        %v401 = vld [vmem:[#allocation7 + $0x144] sm:$0xf]
        %v402 = vld [vmem:[#allocation7 + $0x148] sm:$0xf]
        %v403 = vld [vmem:[#allocation7 + $0x14c] sm:$0xf]
        %v404 = vld [vmem:[#allocation7 + $0x150] sm:$0xf]
        %v405 = vld [vmem:[#allocation7 + $0x154] sm:$0xf]
        %v406 = vld [vmem:[#allocation7 + $0x158] sm:$0xf]
        %v407 = vld [vmem:[#allocation7 + $0x15c] sm:$0xf]
        %v408 = vld [vmem:[#allocation7 + $0x160] sm:$0xf]
        %v409 = vld [vmem:[#allocation7 + $0x164] sm:$0xf]
        %v410 = vld [vmem:[#allocation7 + $0x168] sm:$0xf]
        %v411 = vld [vmem:[#allocation7 + $0x16c] sm:$0xf]
        %v412 = vld [vmem:[#allocation7 + $0x170] sm:$0xf]
        %v413 = vld [vmem:[#allocation7 + $0x174] sm:$0xf]
        %v414 = vld [vmem:[#allocation7 + $0x178] sm:$0xf]
        %v415 = vld [vmem:[#allocation7 + $0x17c] sm:$0xf]
        %v416 = vld [vmem:[#allocation7 + $0x180] sm:$0xf]
        %v417 = vld [vmem:[#allocation7 + $0x184] sm:$0xf]
        %v418 = vld [vmem:[#allocation7 + $0x188] sm:$0xf]
        %v419 = vld [vmem:[#allocation7 + $0x18c] sm:$0xf]
        %v420 = vld [vmem:[#allocation7 + $0x190] sm:$0xf]
        %v421 = vld [vmem:[#allocation7 + $0x194] sm:$0xf]
        %v422 = vld [vmem:[#allocation7 + $0x198] sm:$0xf]
        %v423 = vld [vmem:[#allocation7 + $0x19c] sm:$0xf]
        %v424 = vld [vmem:[#allocation7 + $0x1a0] sm:$0xf]
        %v425 = vld [vmem:[#allocation7 + $0x1a4] sm:$0xf]
        %v426 = vld [vmem:[#allocation7 + $0x1a8] sm:$0xf]
        %v427 = vld [vmem:[#allocation7 + $0x1ac] sm:$0xf]
        %v428 = vld [vmem:[#allocation7 + $0x1b0] sm:$0xf]
        %v429 = vld [vmem:[#allocation7 + $0x1b4] sm:$0xf]
        %v430 = vld [vmem:[#allocation7 + $0x1b8] sm:$0xf]
        %v431 = vld [vmem:[#allocation7 + $0x1bc] sm:$0xf]
        %v432 = vld [vmem:[#allocation7 + $0x1c0] sm:$0xf]
        %v433 = vld [vmem:[#allocation7 + $0x1c4] sm:$0xf]
        %v434 = vld [vmem:[#allocation7 + $0x1c8] sm:$0xf]
        %v435 = vld [vmem:[#allocation7 + $0x1cc] sm:$0xf]
        %v436 = vld [vmem:[#allocation7 + $0x1d0] sm:$0xf]
        %v437 = vld [vmem:[#allocation7 + $0x1d4] sm:$0xf]
        %v438 = vld [vmem:[#allocation7 + $0x1d8] sm:$0xf]
        %v439 = vld [vmem:[#allocation7 + $0x1dc] sm:$0xf]
        %v440 = vld [vmem:[#allocation7 + $0x1e0] sm:$0xf]
        %v441 = vld [vmem:[#allocation7 + $0x1e4] sm:$0xf]
        %v442 = vld [vmem:[#allocation7 + $0x1e8] sm:$0xf]
        %v443 = vld [vmem:[#allocation7 + $0x1ec] sm:$0xf]
        %v444 = vld [vmem:[#allocation7 + $0x1f0] sm:$0xf]
        %v445 = vld [vmem:[#allocation7 + $0x1f4] sm:$0xf]
        %v446 = vld [vmem:[#allocation7 + $0x1f8] sm:$0xf]
        %v447 = vld [vmem:[#allocation7 + $0x1fc] sm:$0xf]
        %v448 = vld [vmem:[#allocation7 + $0x200] sm:$0xf]
        %v449 = vld [vmem:[#allocation7 + $0x204] sm:$0xf]
        %v450 = vld [vmem:[#allocation7 + $0x208] sm:$0xf]
        %v451 = vld [vmem:[#allocation7 + $0x20c] sm:$0xf]
        %v452 = vld [vmem:[#allocation7 + $0x210] sm:$0xf]
        %v453 = vld [vmem:[#allocation7 + $0x214] sm:$0xf]
        %v454 = vld [vmem:[#allocation7 + $0x218] sm:$0xf]
        %v455 = vld [vmem:[#allocation7 + $0x21c] sm:$0xf]
        %v456 = vld [vmem:[#allocation7 + $0x220] sm:$0xf]
        %v457 = vld [vmem:[#allocation7 + $0x224] sm:$0xf]
        %v458 = vld [vmem:[#allocation7 + $0x228] sm:$0xf]
        %v459 = vld [vmem:[#allocation7 + $0x22c] sm:$0xf]
        %v460 = vld [vmem:[#allocation7 + $0x230] sm:$0xf]
        %v461 = vld [vmem:[#allocation7 + $0x234] sm:$0xf]
        %v462 = vld [vmem:[#allocation7 + $0x238] sm:$0xf]
        %v463 = vld [vmem:[#allocation7 + $0x23c] sm:$0xf]
        %v464 = vld [vmem:[#allocation7 + $0x240] sm:$0xf]
        %v465 = vld [vmem:[#allocation7 + $0x244] sm:$0xf]
        %v466 = vld [vmem:[#allocation7 + $0x248] sm:$0xf]
        %v467 = vld [vmem:[#allocation7 + $0x24c] sm:$0xf]
        %v468 = vld [vmem:[#allocation7 + $0x250] sm:$0xf]
        %v469 = vld [vmem:[#allocation7 + $0x254] sm:$0xf]
        %v470 = vld [vmem:[#allocation7 + $0x258] sm:$0xf]
        %v471 = vld [vmem:[#allocation7 + $0x25c] sm:$0xf]
        %v472 = vld [vmem:[#allocation7 + $0x260] sm:$0xf]
        %v473 = vld [vmem:[#allocation7 + $0x264] sm:$0xf]
        %v474 = vld [vmem:[#allocation7 + $0x268] sm:$0xf]
        %v475 = vld [vmem:[#allocation7 + $0x26c] sm:$0xf]
        %v476 = vld [vmem:[#allocation7 + $0x270] sm:$0xf]
        %v477 = vld [vmem:[#allocation7 + $0x274] sm:$0xf]
        %v478 = vld [vmem:[#allocation7 + $0x278] sm:$0xf]
        %v479 = vld [vmem:[#allocation7 + $0x27c] sm:$0xf]
        %v480 = vld [vmem:[#allocation7 + $0x280] sm:$0xf]
        %v481 = vld [vmem:[#allocation7 + $0x284] sm:$0xf]
        %v482 = vld [vmem:[#allocation7 + $0x288] sm:$0xf]
        %v483 = vld [vmem:[#allocation7 + $0x28c] sm:$0xf]
        %v484 = vld [vmem:[#allocation7 + $0x290] sm:$0xf]
        %v485 = vld [vmem:[#allocation7 + $0x294] sm:$0xf]
        %v486 = vld [vmem:[#allocation7 + $0x298] sm:$0xf]
        %v487 = vld [vmem:[#allocation7 + $0x29c] sm:$0xf]
        %v488 = vld [vmem:[#allocation7 + $0x2a0] sm:$0xf]
        %v489 = vld [vmem:[#allocation7 + $0x2a4] sm:$0xf]
        %v490 = vld [vmem:[#allocation7 + $0x2a8] sm:$0xf]
        %v491 = vld [vmem:[#allocation7 + $0x2ac] sm:$0xf]
        %v492 = vld [vmem:[#allocation7 + $0x2b0] sm:$0xf]
        %v493 = vld [vmem:[#allocation7 + $0x2b4] sm:$0xf]
        %v494 = vld [vmem:[#allocation7 + $0x2b8] sm:$0xf]
        %v495 = vld [vmem:[#allocation7 + $0x2bc] sm:$0xf]
        %v496 = vld [vmem:[#allocation7 + $0x2c0] sm:$0xf]
        %v497 = vld [vmem:[#allocation7 + $0x2c4] sm:$0xf]
        %v498 = vld [vmem:[#allocation7 + $0x2c8] sm:$0xf]
        %v499 = vld [vmem:[#allocation7 + $0x2cc] sm:$0xf]
        %v500 = vld [vmem:[#allocation7 + $0x2d0] sm:$0xf]
        %v501 = vld [vmem:[#allocation7 + $0x2d4] sm:$0xf]
        %v502 = vld [vmem:[#allocation7 + $0x2d8] sm:$0xf]
        %v503 = vld [vmem:[#allocation7 + $0x2dc] sm:$0xf]
        %v504 = vld [vmem:[#allocation7 + $0x2e0] sm:$0xf]
        %v505 = vld [vmem:[#allocation7 + $0x2e4] sm:$0xf]
        %v506 = vld [vmem:[#allocation7 + $0x2e8] sm:$0xf]
        %v507 = vld [vmem:[#allocation7 + $0x2ec] sm:$0xf]
        %v508 = vld [vmem:[#allocation7 + $0x2f0] sm:$0xf]
        %v509 = vld [vmem:[#allocation7 + $0x2f4] sm:$0xf]
        %v510 = vld [vmem:[#allocation7 + $0x2f8] sm:$0xf]
        %v511 = vld [vmem:[#allocation7 + $0x2fc] sm:$0xf]
        %v512 = vld [vmem:[%s3] sm:$0x1]
        %v514 = vperm.slane %v512, 0
        %v708 = vunpack.c.l.b16 %v320
        %v709 = vunpack.c.l.b16 %v321
        %v710 = vunpack.c.l.b16 %v322
        %v711 = vunpack.c.l.b16 %v323
        %v712 = vunpack.c.l.b16 %v324
        %v713 = vunpack.c.l.b16 %v325
        %v714 = vunpack.c.l.b16 %v326
        %v715 = vunpack.c.l.b16 %v327
        %v716 = vunpack.c.l.b16 %v328
        %v717 = vunpack.c.l.b16 %v329
        %v718 = vunpack.c.l.b16 %v330
        %v719 = vunpack.c.l.b16 %v331
        %v720 = vunpack.c.l.b16 %v332
        %v721 = vunpack.c.l.b16 %v333
        %v722 = vunpack.c.l.b16 %v334
        %v723 = vunpack.c.l.b16 %v335
        %v724 = vunpack.c.l.b16 %v336
        %v725 = vunpack.c.l.b16 %v337
        %v726 = vunpack.c.l.b16 %v338
        %v727 = vunpack.c.l.b16 %v339
        %v728 = vunpack.c.l.b16 %v340
        %v729 = vunpack.c.l.b16 %v341
        %v730 = vunpack.c.l.b16 %v342
        %v731 = vunpack.c.l.b16 %v343
        %v732 = vunpack.c.l.b16 %v344
        %v733 = vunpack.c.l.b16 %v345
        %v734 = vunpack.c.l.b16 %v346
        %v735 = vunpack.c.l.b16 %v347
        %v736 = vunpack.c.l.b16 %v348
        %v737 = vunpack.c.l.b16 %v349
        %v738 = vunpack.c.l.b16 %v350
        %v739 = vunpack.c.l.b16 %v351
        %v740 = vunpack.c.l.b16 %v352
        %v741 = vunpack.c.l.b16 %v353
        %v742 = vunpack.c.l.b16 %v354
        %v743 = vunpack.c.l.b16 %v355
        %v744 = vunpack.c.l.b16 %v356
        %v745 = vunpack.c.l.b16 %v357
        %v746 = vunpack.c.l.b16 %v358
        %v747 = vunpack.c.l.b16 %v359
        %v748 = vunpack.c.l.b16 %v360
        %v749 = vunpack.c.l.b16 %v361
        %v750 = vunpack.c.l.b16 %v362
        %v751 = vunpack.c.l.b16 %v363
        %v752 = vunpack.c.l.b16 %v364
        %v753 = vunpack.c.l.b16 %v365
        %v754 = vunpack.c.l.b16 %v366
        %v755 = vunpack.c.l.b16 %v367
        %v756 = vunpack.c.l.b16 %v368
        %v757 = vunpack.c.l.b16 %v369
        %v758 = vunpack.c.l.b16 %v370
        %v759 = vunpack.c.l.b16 %v371
        %v760 = vunpack.c.l.b16 %v372
        %v761 = vunpack.c.l.b16 %v373
        %v762 = vunpack.c.l.b16 %v374
        %v763 = vunpack.c.l.b16 %v375
        %v764 = vunpack.c.l.b16 %v376
        %v765 = vunpack.c.l.b16 %v377
        %v766 = vunpack.c.l.b16 %v378
        %v767 = vunpack.c.l.b16 %v379
        %v768 = vunpack.c.l.b16 %v380
        %v769 = vunpack.c.l.b16 %v381
        %v770 = vunpack.c.l.b16 %v382
        %v771 = vunpack.c.l.b16 %v383
        %v772 = vunpack.c.l.b16 %v384
        %v773 = vunpack.c.l.b16 %v385
        %v774 = vunpack.c.l.b16 %v386
        %v775 = vunpack.c.l.b16 %v387
        %v776 = vunpack.c.l.b16 %v388
        %v777 = vunpack.c.l.b16 %v389
        %v778 = vunpack.c.l.b16 %v390
        %v779 = vunpack.c.l.b16 %v391
        %v780 = vunpack.c.l.b16 %v392
        %v781 = vunpack.c.l.b16 %v393
        %v782 = vunpack.c.l.b16 %v394
        %v783 = vunpack.c.l.b16 %v395
        %v784 = vunpack.c.l.b16 %v396
        %v785 = vunpack.c.l.b16 %v397
        %v786 = vunpack.c.l.b16 %v398
        %v787 = vunpack.c.l.b16 %v399
        %v788 = vunpack.c.l.b16 %v400
        %v789 = vunpack.c.l.b16 %v401
        %v790 = vunpack.c.l.b16 %v402
        %v791 = vunpack.c.l.b16 %v403
        %v792 = vunpack.c.l.b16 %v404
        %v793 = vunpack.c.l.b16 %v405
        %v794 = vunpack.c.l.b16 %v406
        %v795 = vunpack.c.l.b16 %v407
        %v796 = vunpack.c.l.b16 %v408
        %v797 = vunpack.c.l.b16 %v409
        %v798 = vunpack.c.l.b16 %v410
        %v799 = vunpack.c.l.b16 %v411
        %v800 = vunpack.c.l.b16 %v412
        %v801 = vunpack.c.l.b16 %v413
        %v802 = vunpack.c.l.b16 %v414
        %v803 = vunpack.c.l.b16 %v415
        %v804 = vunpack.c.l.b16 %v416
        %v805 = vunpack.c.l.b16 %v417
        %v806 = vunpack.c.l.b16 %v418
        %v807 = vunpack.c.l.b16 %v419
        %v808 = vunpack.c.l.b16 %v420
        %v809 = vunpack.c.l.b16 %v421
        %v810 = vunpack.c.l.b16 %v422
        %v811 = vunpack.c.l.b16 %v423
        %v812 = vunpack.c.l.b16 %v424
        %v813 = vunpack.c.l.b16 %v425
        %v814 = vunpack.c.l.b16 %v426
        %v815 = vunpack.c.l.b16 %v427
        %v816 = vunpack.c.l.b16 %v428
        %v817 = vunpack.c.l.b16 %v429
        %v818 = vunpack.c.l.b16 %v430
        %v819 = vunpack.c.l.b16 %v431
        %v820 = vunpack.c.l.b16 %v432
        %v821 = vunpack.c.l.b16 %v433
        %v822 = vunpack.c.l.b16 %v434
        %v823 = vunpack.c.l.b16 %v435
        %v824 = vunpack.c.l.b16 %v436
        %v825 = vunpack.c.l.b16 %v437
        %v826 = vunpack.c.l.b16 %v438
        %v827 = vunpack.c.l.b16 %v439
        %v828 = vunpack.c.l.b16 %v440
        %v829 = vunpack.c.l.b16 %v441
        %v830 = vunpack.c.l.b16 %v442
        %v831 = vunpack.c.l.b16 %v443
        %v832 = vunpack.c.l.b16 %v444
        %v833 = vunpack.c.l.b16 %v445
        %v834 = vunpack.c.l.b16 %v446
        %v835 = vunpack.c.l.b16 %v447
        %v836 = vunpack.c.l.b16 %v448
        %v837 = vunpack.c.l.b16 %v449
        %v838 = vunpack.c.l.b16 %v450
        %v839 = vunpack.c.l.b16 %v451
        %v840 = vunpack.c.l.b16 %v452
        %v841 = vunpack.c.l.b16 %v453
        %v842 = vunpack.c.l.b16 %v454
        %v843 = vunpack.c.l.b16 %v455
        %v844 = vunpack.c.l.b16 %v456
        %v845 = vunpack.c.l.b16 %v457
        %v846 = vunpack.c.l.b16 %v458
        %v847 = vunpack.c.l.b16 %v459
        %v848 = vunpack.c.l.b16 %v460
        %v849 = vunpack.c.l.b16 %v461
        %v850 = vunpack.c.l.b16 %v462
        %v851 = vunpack.c.l.b16 %v463
        %v852 = vunpack.c.l.b16 %v464
        %v853 = vunpack.c.l.b16 %v465
        %v854 = vunpack.c.l.b16 %v466
        %v855 = vunpack.c.l.b16 %v467
        %v856 = vunpack.c.l.b16 %v468
        %v857 = vunpack.c.l.b16 %v469
        %v858 = vunpack.c.l.b16 %v470
        %v859 = vunpack.c.l.b16 %v471
        %v860 = vunpack.c.l.b16 %v472
        %v861 = vunpack.c.l.b16 %v473
        %v862 = vunpack.c.l.b16 %v474
        %v863 = vunpack.c.l.b16 %v475
        %v864 = vunpack.c.l.b16 %v476
        %v865 = vunpack.c.l.b16 %v477
        %v866 = vunpack.c.l.b16 %v478
        %v867 = vunpack.c.l.b16 %v479
        %v868 = vunpack.c.l.b16 %v480
        %v869 = vunpack.c.l.b16 %v481
        %v870 = vunpack.c.l.b16 %v482
        %v871 = vunpack.c.l.b16 %v483
        %v872 = vunpack.c.l.b16 %v484
        %v873 = vunpack.c.l.b16 %v485
        %v874 = vunpack.c.l.b16 %v486
        %v875 = vunpack.c.l.b16 %v487
        %v876 = vunpack.c.l.b16 %v488
        %v877 = vunpack.c.l.b16 %v489
        %v878 = vunpack.c.l.b16 %v490
        %v879 = vunpack.c.l.b16 %v491
        %v880 = vunpack.c.l.b16 %v492
        %v881 = vunpack.c.l.b16 %v493
        %v882 = vunpack.c.l.b16 %v494
        %v883 = vunpack.c.l.b16 %v495
        %v884 = vunpack.c.l.b16 %v496
        %v885 = vunpack.c.l.b16 %v497
        %v886 = vunpack.c.l.b16 %v498
        %v887 = vunpack.c.l.b16 %v499
        %v888 = vunpack.c.l.b16 %v500
        %v889 = vunpack.c.l.b16 %v501
        %v890 = vunpack.c.l.b16 %v502
        %v891 = vunpack.c.l.b16 %v503
        %v892 = vunpack.c.l.b16 %v504
        %v893 = vunpack.c.l.b16 %v505
        %v894 = vunpack.c.l.b16 %v506
        %v895 = vunpack.c.l.b16 %v507
        %v896 = vunpack.c.l.b16 %v508
        %v897 = vunpack.c.l.b16 %v509
        %v898 = vunpack.c.l.b16 %v510
        %v899 = vunpack.c.l.b16 %v511
        %v900 = vpack.c.b16 %v709, %v708
        %v901 = vpack.c.b16 %v711, %v710
        %v902 = vpack.c.b16 %v713, %v712
        %v903 = vpack.c.b16 %v715, %v714
        %v904 = vpack.c.b16 %v717, %v716
        %v905 = vpack.c.b16 %v719, %v718
        %v906 = vpack.c.b16 %v721, %v720
        %v907 = vpack.c.b16 %v723, %v722
        %v908 = vpack.c.b16 %v725, %v724
        %v909 = vpack.c.b16 %v727, %v726
        %v910 = vpack.c.b16 %v729, %v728
        %v911 = vpack.c.b16 %v731, %v730
        %v912 = vpack.c.b16 %v733, %v732
        %v913 = vpack.c.b16 %v735, %v734
        %v914 = vpack.c.b16 %v737, %v736
        %v915 = vpack.c.b16 %v739, %v738
        %v916 = vpack.c.b16 %v741, %v740
        %v917 = vpack.c.b16 %v743, %v742
        %v918 = vpack.c.b16 %v745, %v744
        %v919 = vpack.c.b16 %v747, %v746
        %v920 = vpack.c.b16 %v749, %v748
        %v921 = vpack.c.b16 %v751, %v750
        %v922 = vpack.c.b16 %v753, %v752
        %v923 = vpack.c.b16 %v755, %v754
        %v924 = vpack.c.b16 %v757, %v756
        %v925 = vpack.c.b16 %v759, %v758
        %v926 = vpack.c.b16 %v761, %v760
        %v927 = vpack.c.b16 %v763, %v762
        %v928 = vpack.c.b16 %v765, %v764
        %v929 = vpack.c.b16 %v767, %v766
        %v930 = vpack.c.b16 %v769, %v768
        %v931 = vpack.c.b16 %v771, %v770
        %v932 = vpack.c.b16 %v773, %v772
        %v933 = vpack.c.b16 %v775, %v774
        %v934 = vpack.c.b16 %v777, %v776
        %v935 = vpack.c.b16 %v779, %v778
        %v936 = vpack.c.b16 %v781, %v780
        %v937 = vpack.c.b16 %v783, %v782
        %v938 = vpack.c.b16 %v785, %v784
        %v939 = vpack.c.b16 %v787, %v786
        %v940 = vpack.c.b16 %v789, %v788
        %v941 = vpack.c.b16 %v791, %v790
        %v942 = vpack.c.b16 %v793, %v792
        %v943 = vpack.c.b16 %v795, %v794
        %v944 = vpack.c.b16 %v797, %v796
        %v945 = vpack.c.b16 %v799, %v798
        %v946 = vpack.c.b16 %v801, %v800
        %v947 = vpack.c.b16 %v803, %v802
        %v948 = vpack.c.b16 %v805, %v804
        %v949 = vpack.c.b16 %v807, %v806
        %v950 = vpack.c.b16 %v809, %v808
        %v951 = vpack.c.b16 %v811, %v810
        %v952 = vpack.c.b16 %v813, %v812
        %v953 = vpack.c.b16 %v815, %v814
        %v954 = vpack.c.b16 %v817, %v816
        %v955 = vpack.c.b16 %v819, %v818
        %v956 = vpack.c.b16 %v821, %v820
        %v957 = vpack.c.b16 %v823, %v822
        %v958 = vpack.c.b16 %v825, %v824
        %v959 = vpack.c.b16 %v827, %v826
        %v960 = vpack.c.b16 %v829, %v828
        %v961 = vpack.c.b16 %v831, %v830
        %v962 = vpack.c.b16 %v833, %v832
        %v963 = vpack.c.b16 %v835, %v834
        %v964 = vpack.c.b16 %v837, %v836
        %v965 = vpack.c.b16 %v839, %v838
        %v966 = vpack.c.b16 %v841, %v840
        %v967 = vpack.c.b16 %v843, %v842
        %v968 = vpack.c.b16 %v845, %v844
        %v969 = vpack.c.b16 %v847, %v846
        %v970 = vpack.c.b16 %v849, %v848
        %v971 = vpack.c.b16 %v851, %v850
        %v972 = vpack.c.b16 %v853, %v852
        %v973 = vpack.c.b16 %v855, %v854
        %v974 = vpack.c.b16 %v857, %v856
        %v975 = vpack.c.b16 %v859, %v858
        %v976 = vpack.c.b16 %v861, %v860
        %v977 = vpack.c.b16 %v863, %v862
        %v978 = vpack.c.b16 %v865, %v864
        %v979 = vpack.c.b16 %v867, %v866
        %v980 = vpack.c.b16 %v869, %v868
        %v981 = vpack.c.b16 %v871, %v870
        %v982 = vpack.c.b16 %v873, %v872
        %v983 = vpack.c.b16 %v875, %v874
        %v984 = vpack.c.b16 %v877, %v876
        %v985 = vpack.c.b16 %v879, %v878
        %v986 = vpack.c.b16 %v881, %v880
        %v987 = vpack.c.b16 %v883, %v882
        %v988 = vpack.c.b16 %v885, %v884
        %v989 = vpack.c.b16 %v887, %v886
        %v990 = vpack.c.b16 %v889, %v888
        %v991 = vpack.c.b16 %v891, %v890
        %v992 = vpack.c.b16 %v893, %v892
        %v993 = vpack.c.b16 %v895, %v894
        %v994 = vpack.c.b16 %v897, %v896
        %v995 = vpack.c.b16 %v899, %v898
        %1092 = vmatpush.bf16.msra.mxu0 %v907
        %1093 = vmatpush.bf16.msra.mxu0 %v906
        %1094 = vmatpush.bf16.msra.mxu0 %v905
        %1095 = vmatpush.bf16.msra.mxu0 %v904
        %1096 = vmatpush.bf16.msra.mxu0 %v903
        %1097 = vmatpush.bf16.msra.mxu0 %v902
        %1098 = vmatpush.bf16.msra.mxu0 %v901
        %1099 = vmatpush.bf16.msra.mxu0 %v900
        %1100 = vmatmul.bf16.gmra.mxu0 %v308
        %v1101 = vpop.f32.mrf.mxu0
        %v1102 = vadd.f32 %v514, %v1101
        %v1103 = vpop.f32.mrf.mxu0
        %1104 = vdwg.mxu0
        %1105 = vmatpush.bf16.msra.mxu0 %v915
        %1106 = vmatpush.bf16.msra.mxu0 %v914
        %1107 = vmatpush.bf16.msra.mxu0 %v913
        %1108 = vmatpush.bf16.msra.mxu0 %v912
        %1109 = vmatpush.bf16.msra.mxu0 %v911
        %1110 = vmatpush.bf16.msra.mxu0 %v910
        %1111 = vmatpush.bf16.msra.mxu0 %v909
        %1112 = vmatpush.bf16.msra.mxu0 %v908
        %1113 = vmatmul.bf16.gmra.mxu0 %v309
        %v1114 = vpop.f32.mrf.mxu0
        %v1115 = vadd.f32 %v1102, %v1114
        %v1116 = vpop.f32.mrf.mxu0
        %1117 = vdwg.mxu0
        %1118 = vmatpush.bf16.msra.mxu0 %v923
        %1119 = vmatpush.bf16.msra.mxu0 %v922
        %1120 = vmatpush.bf16.msra.mxu0 %v921
        %1121 = vmatpush.bf16.msra.mxu0 %v920
        %1122 = vmatpush.bf16.msra.mxu0 %v919
        %1123 = vmatpush.bf16.msra.mxu0 %v918
        %1124 = vmatpush.bf16.msra.mxu0 %v917
        %1125 = vmatpush.bf16.msra.mxu0 %v916
        %1126 = vmatmul.bf16.gmra.mxu0 %v310
        %v1127 = vpop.f32.mrf.mxu0
        %v1128 = vadd.f32 %v1115, %v1127
        %v1129 = vpop.f32.mrf.mxu0
        %1130 = vdwg.mxu0
        %1131 = vmatpush.bf16.msra.mxu0 %v931
        %1132 = vmatpush.bf16.msra.mxu0 %v930
        %1133 = vmatpush.bf16.msra.mxu0 %v929
        %1134 = vmatpush.bf16.msra.mxu0 %v928
        %1135 = vmatpush.bf16.msra.mxu0 %v927
        %1136 = vmatpush.bf16.msra.mxu0 %v926
        %1137 = vmatpush.bf16.msra.mxu0 %v925
        %1138 = vmatpush.bf16.msra.mxu0 %v924
        %1139 = vmatmul.bf16.gmra.mxu0 %v311
        %v1140 = vpop.f32.mrf.mxu0
        %v1141 = vadd.f32 %v1128, %v1140
        %v1142 = vpop.f32.mrf.mxu0
        %1143 = vdwg.mxu0
        %1144 = vmatpush.bf16.msra.mxu0 %v939
        %1145 = vmatpush.bf16.msra.mxu0 %v938
        %1146 = vmatpush.bf16.msra.mxu0 %v937
        %1147 = vmatpush.bf16.msra.mxu0 %v936
        %1148 = vmatpush.bf16.msra.mxu0 %v935
        %1149 = vmatpush.bf16.msra.mxu0 %v934
        %1150 = vmatpush.bf16.msra.mxu0 %v933
        %1151 = vmatpush.bf16.msra.mxu0 %v932
        %1152 = vmatmul.bf16.gmra.mxu0 %v312
        %v1153 = vpop.f32.mrf.mxu0
        %v1154 = vadd.f32 %v1141, %v1153
        %v1155 = vpop.f32.mrf.mxu0
        %1156 = vdwg.mxu0
        %1157 = vmatpush.bf16.msra.mxu0 %v947
        %1158 = vmatpush.bf16.msra.mxu0 %v946
        %1159 = vmatpush.bf16.msra.mxu0 %v945
        %1160 = vmatpush.bf16.msra.mxu0 %v944
        %1161 = vmatpush.bf16.msra.mxu0 %v943
        %1162 = vmatpush.bf16.msra.mxu0 %v942
        %1163 = vmatpush.bf16.msra.mxu0 %v941
        %1164 = vmatpush.bf16.msra.mxu0 %v940
        %1165 = vmatmul.bf16.gmra.mxu0 %v313
        %v1166 = vpop.f32.mrf.mxu0
        %v1167 = vadd.f32 %v1154, %v1166
        %v1168 = vpop.f32.mrf.mxu0
        %1169 = vdwg.mxu0
        %1170 = vmatpush.bf16.msra.mxu0 %v955
        %1171 = vmatpush.bf16.msra.mxu0 %v954
        %1172 = vmatpush.bf16.msra.mxu0 %v953
        %1173 = vmatpush.bf16.msra.mxu0 %v952
        %1174 = vmatpush.bf16.msra.mxu0 %v951
        %1175 = vmatpush.bf16.msra.mxu0 %v950
        %1176 = vmatpush.bf16.msra.mxu0 %v949
        %1177 = vmatpush.bf16.msra.mxu0 %v948
        %1178 = vmatmul.bf16.gmra.mxu0 %v314
        %v1179 = vpop.f32.mrf.mxu0
        %v1180 = vadd.f32 %v1167, %v1179
        %v1181 = vpop.f32.mrf.mxu0
        %1182 = vdwg.mxu0
        %1183 = vmatpush.bf16.msra.mxu0 %v963
        %1184 = vmatpush.bf16.msra.mxu0 %v962
        %1185 = vmatpush.bf16.msra.mxu0 %v961
        %1186 = vmatpush.bf16.msra.mxu0 %v960
        %1187 = vmatpush.bf16.msra.mxu0 %v959
        %1188 = vmatpush.bf16.msra.mxu0 %v958
        %1189 = vmatpush.bf16.msra.mxu0 %v957
        %1190 = vmatpush.bf16.msra.mxu0 %v956
        %1191 = vmatmul.bf16.gmra.mxu0 %v315
        %v1192 = vpop.f32.mrf.mxu0
        %v1193 = vadd.f32 %v1180, %v1192
        %v1194 = vpop.f32.mrf.mxu0
        %1195 = vdwg.mxu0
        %1196 = vmatpush.bf16.msra.mxu0 %v971
        %1197 = vmatpush.bf16.msra.mxu0 %v970
        %1198 = vmatpush.bf16.msra.mxu0 %v969
        %1199 = vmatpush.bf16.msra.mxu0 %v968
        %1200 = vmatpush.bf16.msra.mxu0 %v967
        %1201 = vmatpush.bf16.msra.mxu0 %v966
        %1202 = vmatpush.bf16.msra.mxu0 %v965
        %1203 = vmatpush.bf16.msra.mxu0 %v964
        %1204 = vmatmul.bf16.gmra.mxu0 %v316
        %v1205 = vpop.f32.mrf.mxu0
        %v1206 = vadd.f32 %v1193, %v1205
        %v1207 = vpop.f32.mrf.mxu0
        %1208 = vdwg.mxu0
        %1209 = vmatpush.bf16.msra.mxu0 %v979
        %1210 = vmatpush.bf16.msra.mxu0 %v978
        %1211 = vmatpush.bf16.msra.mxu0 %v977
        %1212 = vmatpush.bf16.msra.mxu0 %v976
        %1213 = vmatpush.bf16.msra.mxu0 %v975
        %1214 = vmatpush.bf16.msra.mxu0 %v974
        %1215 = vmatpush.bf16.msra.mxu0 %v973
        %1216 = vmatpush.bf16.msra.mxu0 %v972
        %1217 = vmatmul.bf16.gmra.mxu0 %v317
        %v1218 = vpop.f32.mrf.mxu0
        %v1219 = vadd.f32 %v1206, %v1218
        %v1220 = vpop.f32.mrf.mxu0
        %1221 = vdwg.mxu0
        %1222 = vmatpush.bf16.msra.mxu0 %v987
        %1223 = vmatpush.bf16.msra.mxu0 %v986
        %1224 = vmatpush.bf16.msra.mxu0 %v985
        %1225 = vmatpush.bf16.msra.mxu0 %v984
        %1226 = vmatpush.bf16.msra.mxu0 %v983
        %1227 = vmatpush.bf16.msra.mxu0 %v982
        %1228 = vmatpush.bf16.msra.mxu0 %v981
        %1229 = vmatpush.bf16.msra.mxu0 %v980
        %1230 = vmatmul.bf16.gmra.mxu0 %v318
        %v1231 = vpop.f32.mrf.mxu0
        %v1232 = vadd.f32 %v1219, %v1231
        %v1233 = vpop.f32.mrf.mxu0
        %1234 = vdwg.mxu0
        %1235 = vmatpush.bf16.msra.mxu0 %v995
        %1236 = vmatpush.bf16.msra.mxu0 %v994
        %1237 = vmatpush.bf16.msra.mxu0 %v993
        %1238 = vmatpush.bf16.msra.mxu0 %v992
        %1239 = vmatpush.bf16.msra.mxu0 %v991
        %1240 = vmatpush.bf16.msra.mxu0 %v990
        %1241 = vmatpush.bf16.msra.mxu0 %v989
        %1242 = vmatpush.bf16.msra.mxu0 %v988
        %1243 = vmatmul.bf16.gmra.mxu0 %v319
        %v1244 = vpop.f32.mrf.mxu0
        %v1245 = vadd.f32 %v1232, %v1244
        %v1246 = vpop.f32.mrf.mxu0
        %1247 = vdwg.mxu0
        %1248 = vst [vmem:[%s295] sm:$0xff] %v1245
        %s1249 = smul.u32 %s36, 8
        %v1250 = vlaneseq
        %v1251 = vshrl.u32 %v1250, 7
        %s1252 = sadd.s32 %s1249, 0
        %s1253 = sld [smem:[#allocation3 + %s1252]]
        %s1254 = scalar_lea.vmem [#allocation9], %s1253
        %v1255 = vld [vmem:[%s1254] sm:$0x1]
        %vm1256 = vcmp.eq.s32.totalorder %v1251, 0
        %v1257 = vperm.slane %v1255, 0
        %v1258 = vsel %vm1256, %v1257, 0.0
        %s1259 = sadd.s32 %s1252, 1
        %s1260 = sld [smem:[#allocation3 + %s1259]]
        %s1261 = scalar_lea.vmem [#allocation9], %s1260
        %v1262 = vld [vmem:[%s1261] sm:$0x1]
        %vm1263 = vcmp.eq.s32.totalorder %v1251, 1
        %v1264 = vperm.slane %v1262, 0
        %v1265 = vsel %vm1263, %v1264, %v1258
        %s1266 = sadd.s32 %s1252, 2
        %s1267 = sld [smem:[#allocation3 + %s1266]]
        %s1268 = scalar_lea.vmem [#allocation9], %s1267
        %v1269 = vld [vmem:[%s1268] sm:$0x1]
        %vm1270 = vcmp.eq.s32.totalorder %v1251, 2
        %v1271 = vperm.slane %v1269, 0
        %v1272 = vsel %vm1270, %v1271, %v1265
        %s1273 = sadd.s32 %s1252, 3
        %s1274 = sld [smem:[#allocation3 + %s1273]]
        %s1275 = scalar_lea.vmem [#allocation9], %s1274
        %v1276 = vld [vmem:[%s1275] sm:$0x1]
        %vm1277 = vcmp.eq.s32.totalorder %v1251, 3
        %v1278 = vperm.slane %v1276, 0
        %v1279 = vsel %vm1277, %v1278, %v1272
        %s1280 = sadd.s32 %s1252, 4
        %s1281 = sld [smem:[#allocation3 + %s1280]]
        %s1282 = scalar_lea.vmem [#allocation9], %s1281
        %v1283 = vld [vmem:[%s1282] sm:$0x1]
        %vm1284 = vcmp.eq.s32.totalorder %v1251, 4
        %v1285 = vperm.slane %v1283, 0
        %v1286 = vsel %vm1284, %v1285, %v1279
        %s1287 = sadd.s32 %s1252, 5
        %s1288 = sld [smem:[#allocation3 + %s1287]]
        %s1289 = scalar_lea.vmem [#allocation9], %s1288
        %v1290 = vld [vmem:[%s1289] sm:$0x1]
        %vm1291 = vcmp.eq.s32.totalorder %v1251, 5
        %v1292 = vperm.slane %v1290, 0
        %v1293 = vsel %vm1291, %v1292, %v1286
        %s1294 = sadd.s32 %s1252, 6
        %s1295 = sld [smem:[#allocation3 + %s1294]]
        %s1296 = scalar_lea.vmem [#allocation9], %s1295
        %v1297 = vld [vmem:[%s1296] sm:$0x1]
        %vm1298 = vcmp.eq.s32.totalorder %v1251, 6
        %v1299 = vperm.slane %v1297, 0
        %v1300 = vsel %vm1298, %v1299, %v1293
        %s1301 = sadd.s32 %s1252, 7
        %s1302 = sld [smem:[#allocation3 + %s1301]]
        %s1303 = scalar_lea.vmem [#allocation9], %s1302
        %v1304 = vld [vmem:[%s1303] sm:$0x1]
        %vm1305 = vcmp.eq.s32.totalorder %v1251, 7
        %v1306 = vperm.slane %v1304, 0
        %v1307 = vsel %vm1305, %v1306, %v1300
        %1308 = vst [vmem:[%s288] sm:$0xff] %v1307
        %s1309 = sand.u32 %s133, 1
        %s1310 = scalar_lea.sflag [#allocation6], %s1309
        %s1311 = sand.u32 %s133, 1
        %s1312 = smul.addr %s1311, 8
        %s1313 = scalar_lea.vmem [#allocation10], %s1312
        %s1314 = sand.u32 %s159, 1
        %s1315 = scalar_lea.sflag [#allocation12], %s1314
        %s1316 = sand.u32 %s159, 1
        %s1317 = smul.addr %s1316, 8
        %s1318 = scalar_lea.vmem [#allocation11], %s1317
        // Predicated region
        $region49: #{tpu_custom_call.1} parent=35 // pred_check
          %p1319 = pneg %p143
        $region50: #{tpu_custom_call.1} parent=35 // pred_check_branch
          %1321 = sbr.rel (%p1319) target = $region52
        $region51: #{tpu_custom_call.1} parent=35 // pred_region
          %1323 = vsyncadd %s1310, 0
          %s1324 = smul.addr %s36, 8
          %s1325 = scalar_lea.hbm %s5, %s1324
          %s1327 = sshll.u32 %s1313, 4
          %s1328 = int_to_ptr.vmem [resolvable:$true] %s1327
          %s1329 = sshll.u32 %s1325, 4
          %s1330 = int_to_ptr.hbm [resolvable:$true] %s1329
          %1332 = dma.vmem_to_hbm [thread:$0]  %s1328, 128, %s1330, %s1310
        $region52: #{tpu_custom_call.1} parent=35 // pred_fallthru
          _
        // Predicated region
        $region53: #{tpu_custom_call.1} parent=35 // pred_check
          %p1333 = pneg %p169
        $region54: #{tpu_custom_call.1} parent=35 // pred_check_branch
          %1335 = sbr.rel (%p1333) target = $region56
        $region55: #{tpu_custom_call.1} parent=35 // pred_region
          %1337 = vsyncadd %s1315, 0
          %s1338 = smul.addr %s36, 8
          %s1339 = scalar_lea.hbm %s6, %s1338
          %s1341 = sshll.u32 %s1318, 4
          %s1342 = int_to_ptr.vmem [resolvable:$true] %s1341
          %s1343 = sshll.u32 %s1339, 4
          %s1344 = int_to_ptr.hbm [resolvable:$true] %s1343
          %1346 = dma.vmem_to_hbm [thread:$0]  %s1342, 128, %s1344, %s1315
        $region56: #{tpu_custom_call.1} parent=35 // pred_fallthru
          _
      $region36: #{tpu_custom_call.1} parent=5 // pred_fallthru
        _
      %p1347 = scmp.le.s32.totalorder 2, %s31
      // Predicated region
      $region57: #{tpu_custom_call.1} parent=5 // pred_check
        %p1348 = pneg %p1347
      $region58: #{tpu_custom_call.1} parent=5 // pred_check_branch
        %1350 = sbr.rel (%p1348) target = $region60
      $region59: #{tpu_custom_call.1} parent=5 // pred_region
        %s1351 = ssub.s32 %s31, 2
        // Predicated region
        $region61: #{tpu_custom_call.1} parent=59 // pred_check
          %p1352 = pneg %p149
        $region62: #{tpu_custom_call.1} parent=59 // pred_check_branch
          %1354 = sbr.rel (%p1352) target = $region64
        $region63: #{tpu_custom_call.1} parent=59 // pred_region
          %s1355 = sand.u32 %s134, 1
          %s1356 = scalar_lea.sflag [#allocation6], %s1355
          %s1357 = sand.u32 %s134, 1
          %s1358 = smul.addr %s1357, 8
          %s1359 = scalar_lea.vmem [#allocation10], %s1358
          %1361 = dma.done %s1356, 128
        $region64: #{tpu_custom_call.1} parent=59 // pred_fallthru
          _
        // Predicated region
        $region65: #{tpu_custom_call.1} parent=59 // pred_check
          %p1362 = pneg %p175
        $region66: #{tpu_custom_call.1} parent=59 // pred_check_branch
          %1364 = sbr.rel (%p1362) target = $region68
        $region67: #{tpu_custom_call.1} parent=59 // pred_region
          %s1365 = sand.u32 %s160, 1
          %s1366 = scalar_lea.sflag [#allocation12], %s1365
          %s1367 = sand.u32 %s160, 1
          %s1368 = smul.addr %s1367, 8
          %s1369 = scalar_lea.vmem [#allocation11], %s1368
          %1371 = dma.done %s1366, 128
        $region68: #{tpu_custom_call.1} parent=59 // pred_fallthru
          _
      $region60: #{tpu_custom_call.1} parent=5 // pred_fallthru
        _
    $region6: #{tpu_custom_call.1} parent=1 // loop_footer
      %s35 = sadd.s32 1, %s31
    $region7: #{tpu_custom_call.1} parent=1 // loop_footer_branch
      %30 = sbr.rel target = $region3
    $region8: #{tpu_custom_call.1} parent=1 // loop_exit
      _
    %1372 = vsyncpa [#allocation5], 1
    %s1373 = scalar_lea.sflag [#allocation5], 1
    %1374 = vsyncpa %s1373, 1
    %1375 = vsyncpa [#allocation8], 1
    %1376 = vsyncpa [#allocation6], 1
    %s1377 = scalar_lea.sflag [#allocation6], 1
    %1378 = vsyncpa %s1377, 1
    %1379 = vsyncpa [#allocation12], 1
    %s1380 = scalar_lea.sflag [#allocation12], 1
    %1381 = vsyncpa %s1380, 1

</llo_original>
